<compile_context>
chip_gen: v7x
topology: tpu7x:2x2x1
jax: 0.10.0
libtpu: 0.0.40
codegen_flags: <defaults>
</compile_context>

<pallas_src>
import jax
import jax.numpy as jnp
from jax import lax
from jax.experimental import pallas as pl
from jax.experimental.pallas import tpu as pltpu

_SQRT2 = 1.4142135623730951
_LN_EPS = 1e-6
_VMEM_HEADROOM = 4 << 20  # compiler-internal scratch / misc buffers


# --------------------------------------------------------------------------------------
# Kernel bodies
# --------------------------------------------------------------------------------------
def _gelu_erf(h):
    # Exact (erf) GELU -- matches torch.nn.functional.gelu default.
    # TODO(synk): on v6e/v7x a tanh-approx GELU (EUP) or bf16 GELU frees the VALU slot
    # if the numerics deviation is acceptable for the target model.
    return 0.5 * h * (1.0 + lax.erf(h * (1.0 / _SQRT2)))


def _layer_norm_affine(y, g, b):
    # torch.nn.LayerNorm: biased variance, eps=1e-6 inside rsqrt.
    mu = jnp.mean(y, axis=-1, keepdims=True)
    var = jnp.mean((y - mu) * (y - mu), axis=-1, keepdims=True)
    return (y - mu) * lax.rsqrt(var + _LN_EPS) * g + b


def _ffn_ln_kernel_resident(x_ref, w1_ref, b1_ref, w2_ref, b2_ref, g_ref, beta_ref,
                            o_ref):
    """Whole d_hid resident in VMEM: one grid step per row tile, no accumulator."""
    xb = x_ref[...].astype(jnp.bfloat16)
    h = jnp.dot(xb, w1_ref[...], preferred_element_type=jnp.float32) + b1_ref[...]
    h = _gelu_erf(h)
    y = jnp.dot(h.astype(jnp.bfloat16), w2_ref[...],
                preferred_element_type=jnp.float32) + b2_ref[...]
    # TODO(synk): dropout is identity here (inference); training-mode masking would use
    # pltpu.prng_seed / pltpu.prng_random_bits.
    o_ref[...] = _layer_norm_affine(y, g_ref[...], beta_ref[...]).astype(o_ref.dtype)


def _ffn_ln_kernel_chunked(x_ref, w1_ref, b1_ref, w2_ref, b2_ref, g_ref, beta_ref,
                           o_ref, acc_ref):
    """d_hid chunked along the second ('arbitrary') grid axis with an f32 accumulator."""
    k = pl.program_id(1)

    @pl.when(k == 0)
    def _init():
        acc_ref[...] = jnp.zeros_like(acc_ref)

    xb = x_ref[...].astype(jnp.bfloat16)
    h = jnp.dot(xb, w1_ref[...], preferred_element_type=jnp.float32) + b1_ref[...]
    h = _gelu_erf(h)  # elementwise per hidden column -> chunking over d_hid is exact
    acc_ref[...] += jnp.dot(h.astype(jnp.bfloat16), w2_ref[...],
                            preferred_element_type=jnp.float32)

    @pl.when(k == pl.num_programs(1) - 1)
    def _finalize():
        y = acc_ref[...] + b2_ref[...]
        o_ref[...] = _layer_norm_affine(y, g_ref[...], beta_ref[...]).astype(o_ref.dtype)


# --------------------------------------------------------------------------------------
# Tiling / VMEM budgeting
# --------------------------------------------------------------------------------------
def _round_up(x, m):
    return (x + m - 1) // m * m


def _cdiv(a, b):
    return -(-a // b)


def _physical_vmem_bytes():
    try:
        info = pltpu.get_tpu_info()
        v = int(getattr(info, "vmem_capacity_bytes", 0))
        if v > 0:
            return v
    except Exception:
        pass
    return 64 << 20  # conservative fallback: v7x per-TensorCore VMEM


def _vmem_block_bytes(tm, tk, d_in, d_out, x_isz, out_isz):
    """Double-buffered in/out blocks + f32 accumulator + GELU intermediate."""
    b = 2 * tm * d_in * x_isz          # x row tile
    b += 2 * d_in * tk * 2             # w1 chunk (bf16)
    b += 2 * tk * 4                    # b1 chunk (f32)
    b += 2 * tk * d_out * 2            # w2 chunk (bf16)
    b += 2 * 3 * d_out * 4             # b2, gamma, beta (f32)
    b += 2 * tm * d_out * out_isz      # output tile
    b += tm * d_out * 4                # f32 accumulator scratch
    b += tm * tk * (4 + 2)             # GELU intermediate (f32) + bf16 cast copy
    return b


def _select_tiling(N, d_in, d_hid, d_out, x_isz, out_isz, tm_req, max_hid_chunk, cap):
    """Return (tm, tk, d_hid_padded, weights_resident)."""
    # Row-tile candidates: descending from the request, multiples of 16, and kept at
    # >= 2 tiles for larger N so the 'parallel' row axis can use both v7x TensorCores.
    tm_top = min(_round_up(max(tm_req, 16), 16), _round_up(N, 16))
    if N >= 512:
        tm_top = min(tm_top, _round_up(_cdiv(N, 2), 16))
    tm_top = max(tm_top, 16)
    tms = []
    t = tm_top
    while True:
        tms.append(t)
        if t <= 16:
            break
        t = max(16, _round_up(t // 2, 16))

    # 1) Resident weights (tk = d_hid): weights DMAed once for the whole kernel.
    if max_hid_chunk is None or d_hid <= max_hid_chunk:
        tm_min_res = min(256, tm_top)  # don't shrink rows below this just for residency
        for tm in tms:
            if tm < tm_min_res:
                break
            if (_vmem_block_bytes(tm, d_hid, d_in, d_out, x_isz, out_isz)
                    + _VMEM_HEADROOM <= cap):
                return tm, d_hid, d_hid, True

    # 2) Chunked d_hid: pad to a multiple of 256 (full MXU occupancy on v6e/v7x),
    #    take the largest 256-multiple chunk that divides the padded axis and fits.
    d_hid_pad = _round_up(d_hid, 256)
    tk_cap = d_hid_pad
    if max_hid_chunk is not None:
        tk_cap = min(tk_cap, max(256, max_hid_chunk - max_hid_chunk % 256))
    for tm in tms:
        tk = tk_cap
        while tk >= 256:
            if d_hid_pad % tk == 0 and (
                    _vmem_block_bytes(tm, tk, d_in, d_out, x_isz, out_isz)
                    + _VMEM_HEADROOM <= cap):
                return tm, tk, d_hid_pad, False
            tk -= 256
    # Fallback for extreme shapes: smallest configuration.
    return 16, 256, d_hid_pad, False


# --------------------------------------------------------------------------------------
# Wrapper
# --------------------------------------------------------------------------------------
def positionwise_feed_forward(x, w1, b1, w2, b2, gamma, beta, *,
                              tm=2048, max_hid_chunk=None, out_dtype=None):
    """x: (B, S, d_in) -> (B, S, d_out). Weights stored as (in, out) (nn.Linear.weight.T).

    out_dtype defaults to x.dtype (module semantics); pass jnp.bfloat16 to halve the
    output VMEM/HBM stream when the downstream consumer tolerates it.
    """
    B, S, d_in = x.shape
    d_hid = w1.shape[1]
    d_out = w2.shape[1]
    N = B * S
    out_dtype = x.dtype if out_dtype is None else out_dtype

    x_isz = jnp.dtype(x.dtype).itemsize
    out_isz = jnp.dtype(out_dtype).itemsize

    # Per-generation VMEM cap: ~54 MiB on v7x (64 MiB phys), ~108 MiB on v5e/v6e (128 MiB).
    cap = min(int(_physical_vmem_bytes() * 0.85), 112 << 20)

    tm_eff, tk, d_hid_pad, resident = _select_tiling(
        N, d_in, d_hid, d_out, x_isz, out_isz, tm, max_hid_chunk, cap)
    n_k = d_hid_pad // tk
    n_rows = _cdiv(N, tm_eff)

    # ---- host-side (one-time, amortizable) weight prep --------------------------------
    # bf16 matmul operands; f32 bias / LayerNorm params.  d_hid is zero-padded so padded
    # hidden columns contribute exactly 0 (w2 pad rows are zero, GELU(0)=0).
    w1b = w1.astype(jnp.bfloat16)
    w2b = w2.astype(jnp.bfloat16)
    b1f = b1.astype(jnp.float32)
    if d_hid_pad != d_hid:
        pad = d_hid_pad - d_hid
        w1b = jnp.pad(w1b, ((0, 0), (0, pad)))
        b1f = jnp.pad(b1f, ((0, pad),))
        w2b = jnp.pad(w2b, ((0, pad), (0, 0)))
    # Chunk-major w1 (n_k, d_in, tk): every weight-chunk DMA is fully contiguous.
    w1c = w1b.reshape(d_in, n_k, tk).transpose(1, 0, 2)
    b1c = b1f.reshape(n_k, 1, tk)
    b2f = b2.reshape(1, d_out).astype(jnp.float32)
    gf = gamma.reshape(1, d_out).astype(jnp.float32)
    betaf = beta.reshape(1, d_out).astype(jnp.float32)

    # x stays in its native dtype (cast to bf16 inside the kernel): no host-side pad or
    # cast pass over the activations.  The ragged last row tile is masked by Pallas and
    # LayerNorm is per-row, so garbage rows cannot pollute valid rows.
    x2 = x.reshape(N, d_in)

    need = _vmem_block_bytes(tm_eff, tk, d_in, d_out, x_isz, out_isz) + _VMEM_HEADROOM
    vmem_limit = int(min(cap, max(need, 32 << 20)))

    # TODO(synk): once pl.Buffered(1) is confirmed on the target jax version, single-
    # buffer the constant-index weight/bias BlockSpecs (pipeline_mode=pl.Buffered(1)) to
    # free VMEM headroom on v7x (their second pipeline buffer is never used).
    if resident:
        grid = (n_rows,)
        in_specs = [
            pl.BlockSpec((tm_eff, d_in), lambda i: (i, 0)),       # x row tile
            pl.BlockSpec((None, d_in, tk), lambda i: (0, 0, 0)),  # w1 (resident)
            pl.BlockSpec((None, 1, tk), lambda i: (0, 0, 0)),     # b1
            pl.BlockSpec((tk, d_out), lambda i: (0, 0)),          # w2 (resident)
            pl.BlockSpec((1, d_out), lambda i: (0, 0)),           # b2
            pl.BlockSpec((1, d_out), lambda i: (0, 0)),           # layernorm gamma
            pl.BlockSpec((1, d_out), lambda i: (0, 0)),           # layernorm beta
        ]
        out_specs = pl.BlockSpec((tm_eff, d_out), lambda i: (i, 0))
        scratch_shapes = []
        kernel = _ffn_ln_kernel_resident
        dim_sem = ("parallel",)
    else:
        grid = (n_rows, n_k)  # reduction (hid-chunk) axis last
        in_specs = [
            pl.BlockSpec((tm_eff, d_in), lambda i, k: (i, 0)),       # x rows (resident over k)
            pl.BlockSpec((None, d_in, tk), lambda i, k: (k, 0, 0)),  # w1 chunk (contiguous)
            pl.BlockSpec((None, 1, tk), lambda i, k: (k, 0, 0)),     # b1 chunk
            pl.BlockSpec((tk, d_out), lambda i, k: (k, 0)),          # w2 chunk (contiguous)
            pl.BlockSpec((1, d_out), lambda i, k: (0, 0)),           # b2
            pl.BlockSpec((1, d_out), lambda i, k: (0, 0)),           # layernorm gamma
            pl.BlockSpec((1, d_out), lambda i, k: (0, 0)),           # layernorm beta
        ]
        out_specs = pl.BlockSpec((tm_eff, d_out), lambda i, k: (i, 0))
        scratch_shapes = [pltpu.VMEM((tm_eff, d_out), jnp.float32)]
        kernel = _ffn_ln_kernel_chunked
        dim_sem = ("parallel", "arbitrary")

    out = pl.pallas_call(
        kernel,
        out_shape=jax.ShapeDtypeStruct((N, d_out), out_dtype),
        grid_spec=pltpu.PrefetchScalarGridSpec(
            num_scalar_prefetch=0,
            grid=grid,
            in_specs=in_specs,
            out_specs=out_specs,
            scratch_shapes=scratch_shapes,
        ),
        compiler_params=pltpu.CompilerParams(
            dimension_semantics=dim_sem,
            vmem_limit_bytes=vmem_limit),
    )(x2, w1c, b1c, w2b, b2f, gf, betaf)

    return out.reshape(B, S, d_out)


# --------------------------------------------------------------------------------------
# Params / references / demo
# --------------------------------------------------------------------------------------
def init_params(key, d_in, d_hid, d_out, dtype=jnp.float32):
    """Deterministic synthetic params mirroring nn.Linear / nn.LayerNorm shapes."""
    k1, k2, k3, k4 = jax.random.split(key, 4)
    lim1 = 1.0 / jnp.sqrt(d_in)
    w1 = jax.random.uniform(k1, (d_in, d_hid), dtype, -lim1, lim1)
    b1 = jax.random.uniform(k2, (d_hid,), dtype, -lim1, lim1)
    lim2 = 1.0 / jnp.sqrt(d_hid)
    w2 = jax.random.uniform(k3, (d_hid, d_out), dtype, -lim2, lim2)
    b2 = jax.random.uniform(k4, (d_out,), dtype, -lim2, lim2)
    gamma = jnp.ones((d_out,), dtype)   # nn.LayerNorm default weight
    beta = jnp.zeros((d_out,), dtype)   # nn.LayerNorm default bias
    return w1, b1, w2, b2, gamma, beta


def _reference_f32(x, w1, b1, w2, b2, gamma, beta):
    h = x @ w1 + b1
    h = 0.5 * h * (1.0 + lax.erf(h / _SQRT2))
    y = h @ w2 + b2
    mu = jnp.mean(y, axis=-1, keepdims=True)
    var = jnp.mean((y - mu) ** 2, axis=-1, keepdims=True)
    return (y - mu) * lax.rsqrt(var + _LN_EPS) * gamma + beta


def _reference_bf16(x, w1, b1, w2, b2, gamma, beta):
    """Mirrors the kernel's numerics: bf16 matmul operands, f32 accumulation/LN."""
    xb = x.astype(jnp.bfloat16)
    w1b = w1.astype(jnp.bfloat16)
    w2b = w2.astype(jnp.bfloat16)
    h = jnp.dot(xb, w1b, preferred_element_type=jnp.float32) + b1
    h = 0.5 * h * (1.0 + lax.erf(h / _SQRT2))
    y = jnp.dot(h.astype(jnp.bfloat16), w2b, preferred_element_type=jnp.float32) + b2
    mu = jnp.mean(y, axis=-1, keepdims=True)
    var = jnp.mean((y - mu) ** 2, axis=-1, keepdims=True)
    return (y - mu) * lax.rsqrt(var + _LN_EPS) * gamma + beta


def _run_case(key, B, S, d_in, d_hid, d_out, **kwargs):
    kx, kp = jax.random.split(key)
    x = jax.random.normal(kx, (B, S, d_in), jnp.float32)
    params = init_params(kp, d_in, d_hid, d_out)
    out = jax.block_until_ready(positionwise_feed_forward(x, *params, **kwargs))
    assert out.shape == (B, S, d_out)
    ref_b = _reference_bf16(x, *params)
    ref_f = _reference_f32(x, *params)
    o32 = out.astype(jnp.float32)
    assert jnp.max(jnp.abs(o32 - ref_b)) < 5e-3, "mismatch vs bf16-emulated reference"
    assert jnp.max(jnp.abs(o32 - ref_f)) < 1e-1, "mismatch vs f32 reference"
    return out


if __name__ == "__main__":
    key = jax.random.PRNGKey(0)
    k1, k2 = jax.random.split(key)

    # Small case -> resident-weight (single hid chunk) kernel.
    _run_case(k1, B=2, S=8, d_in=32, d_hid=64, d_out=32)

    # Case forcing the chunked path (d_hid 384 padded to 512, tk=256, n_k=2): exercises
    # the f32 accumulator, pl.when init/finalize, and the chunk-major w1 layout.
    _run_case(k2, B=2, S=64, d_in=128, d_hid=384, d_out=128, max_hid_chunk=256)

    print("KERNEL_OK")
</pallas_src>

<mosaic_0001>
module attributes {stable_mosaic.version = 11 : i64} {
  func.func @_ffn_ln_kernel_resident(%arg0: i32, %arg1: memref<16x32xf32, #tpu.memory_space<vmem>>, %arg2: memref<1x32x64xbf16, #tpu.memory_space<vmem>>, %arg3: memref<1x1x64xf32, #tpu.memory_space<vmem>>, %arg4: memref<64x32xbf16, #tpu.memory_space<vmem>>, %arg5: memref<1x32xf32, #tpu.memory_space<vmem>>, %arg6: memref<1x32xf32, #tpu.memory_space<vmem>>, %arg7: memref<1x32xf32, #tpu.memory_space<vmem>>, %arg8: memref<16x32xf32, #tpu.memory_space<vmem>>) attributes {dimension_semantics = [#tpu.dimension_semantics<parallel>], iteration_bounds = array<i64: 1>, scalar_prefetch = 0 : i64, scratch_operands = 0 : i64, tpu.core_type = #tpu.core_type<tc>, window_params = [{transform_indices = @transform_0, window_bounds = array<i64: 16, 32>}, {pipeline_mode = #tpu.pipeline_mode<synchronous>, transform_indices = @transform_1, window_bounds = array<i64: 1, 32, 64>}, {pipeline_mode = #tpu.pipeline_mode<synchronous>, transform_indices = @transform_2, window_bounds = array<i64: 1, 1, 64>}, {pipeline_mode = #tpu.pipeline_mode<synchronous>, transform_indices = @transform_3, window_bounds = array<i64: 64, 32>}, {pipeline_mode = #tpu.pipeline_mode<synchronous>, transform_indices = @transform_4, window_bounds = array<i64: 1, 32>}, {pipeline_mode = #tpu.pipeline_mode<synchronous>, transform_indices = @transform_5, window_bounds = array<i64: 1, 32>}, {pipeline_mode = #tpu.pipeline_mode<synchronous>, transform_indices = @transform_6, window_bounds = array<i64: 1, 32>}, {transform_indices = @transform_7, window_bounds = array<i64: 16, 32>}]} {
    %c0 = arith.constant 0 : index
    %c0_0 = arith.constant 0 : index
    %0 = vector.load %arg1[%c0, %c0_0] : memref<16x32xf32, #tpu.memory_space<vmem>>, vector<16x32xf32>
    %1 = arith.truncf %0 : vector<16x32xf32> to vector<16x32xbf16>
    %c0_1 = arith.constant 0 : index
    %c0_2 = arith.constant 0 : index
    %c0_3 = arith.constant 0 : index
    %2 = vector.load %arg2[%c0_1, %c0_2, %c0_3] : memref<1x32x64xbf16, #tpu.memory_space<vmem>>, vector<1x32x64xbf16>
    %3 = vector.shape_cast %2 : vector<1x32x64xbf16> to vector<32x64xbf16>
    %cst = arith.constant dense<0.000000e+00> : vector<16x64xf32>
    %4 = tpu.matmul %1, %3, %cst {dimension_numbers = #tpu.dot_dimension_numbers<[1], [0], [0], [1], [0, 0, 1, 1], [], []>} : vector<16x32xbf16>, vector<32x64xbf16>, vector<16x64xf32> -> vector<16x64xf32>
    %c0_4 = arith.constant 0 : index
    %c0_5 = arith.constant 0 : index
    %c0_6 = arith.constant 0 : index
    %5 = vector.load %arg3[%c0_4, %c0_5, %c0_6] : memref<1x1x64xf32, #tpu.memory_space<vmem>>, vector<1x1x64xf32>
    %6 = vector.shape_cast %5 : vector<1x1x64xf32> to vector<1x64xf32>
    %7 = vector.broadcast %6 : vector<1x64xf32> to vector<16x64xf32>
    %8 = arith.addf %4, %7 : vector<16x64xf32>
    %cst_7 = arith.constant 5.000000e-01 : f32
    %9 = vector.broadcast %cst_7 : f32 to vector<16x64xf32>
    %10 = arith.mulf %9, %8 : vector<16x64xf32>
    %cst_8 = arith.constant 0.707106769 : f32
    %11 = vector.broadcast %cst_8 : f32 to vector<16x64xf32>
    %12 = arith.mulf %8, %11 : vector<16x64xf32>
    %13 = math.erf %12 : vector<16x64xf32>
    %cst_9 = arith.constant 1.000000e+00 : f32
    %14 = vector.broadcast %cst_9 : f32 to vector<16x64xf32>
    %15 = arith.addf %14, %13 : vector<16x64xf32>
    %16 = arith.mulf %10, %15 : vector<16x64xf32>
    %17 = arith.truncf %16 : vector<16x64xf32> to vector<16x64xbf16>
    %c0_10 = arith.constant 0 : index
    %c0_11 = arith.constant 0 : index
    %18 = vector.load %arg4[%c0_10, %c0_11] : memref<64x32xbf16, #tpu.memory_space<vmem>>, vector<64x32xbf16>
    %cst_12 = arith.constant dense<0.000000e+00> : vector<16x32xf32>
    %19 = tpu.matmul %17, %18, %cst_12 {dimension_numbers = #tpu.dot_dimension_numbers<[1], [0], [0], [1], [0, 0, 1, 1], [], []>} : vector<16x64xbf16>, vector<64x32xbf16>, vector<16x32xf32> -> vector<16x32xf32>
    %c0_13 = arith.constant 0 : index
    %c0_14 = arith.constant 0 : index
    %20 = vector.load %arg5[%c0_13, %c0_14] : memref<1x32xf32, #tpu.memory_space<vmem>>, vector<1x32xf32>
    %21 = vector.broadcast %20 : vector<1x32xf32> to vector<16x32xf32>
    %22 = arith.addf %19, %21 : vector<16x32xf32>
    %c0_15 = arith.constant 0 : index
    %c0_16 = arith.constant 0 : index
    %23 = vector.load %arg6[%c0_15, %c0_16] : memref<1x32xf32, #tpu.memory_space<vmem>>, vector<1x32xf32>
    %c0_17 = arith.constant 0 : index
    %c0_18 = arith.constant 0 : index
    %24 = vector.load %arg7[%c0_17, %c0_18] : memref<1x32xf32, #tpu.memory_space<vmem>>, vector<1x32xf32>
    %cst_19 = arith.constant dense<0.000000e+00> : vector<16xf32>
    %25 = vector.multi_reduction <add>, %22, %cst_19 [1] : vector<16x32xf32> to vector<16xf32>
    %26 = vector.shape_cast %25 : vector<16xf32> to vector<16x1xf32>
    %cst_20 = arith.constant 3.200000e+01 : f32
    %27 = vector.broadcast %cst_20 : f32 to vector<16x1xf32>
    %28 = arith.divf %26, %27 : vector<16x1xf32>
    %29 = vector.broadcast %28 : vector<16x1xf32> to vector<16x32xf32>
    %30 = arith.subf %22, %29 : vector<16x32xf32>
    %31 = vector.broadcast %28 : vector<16x1xf32> to vector<16x32xf32>
    %32 = arith.subf %22, %31 : vector<16x32xf32>
    %33 = arith.mulf %30, %32 : vector<16x32xf32>
    %cst_21 = arith.constant dense<0.000000e+00> : vector<16xf32>
    %34 = vector.multi_reduction <add>, %33, %cst_21 [1] : vector<16x32xf32> to vector<16xf32>
    %35 = vector.shape_cast %34 : vector<16xf32> to vector<16x1xf32>
    %cst_22 = arith.constant 3.200000e+01 : f32
    %36 = vector.broadcast %cst_22 : f32 to vector<16x1xf32>
    %37 = arith.divf %35, %36 : vector<16x1xf32>
    %38 = vector.broadcast %28 : vector<16x1xf32> to vector<16x32xf32>
    %39 = arith.subf %22, %38 : vector<16x32xf32>
    %cst_23 = arith.constant 9.99999997E-7 : f32
    %40 = vector.broadcast %cst_23 : f32 to vector<16x1xf32>
    %41 = arith.addf %37, %40 : vector<16x1xf32>
    %42 = math.rsqrt %41 : vector<16x1xf32>
    %43 = vector.broadcast %42 : vector<16x1xf32> to vector<16x32xf32>
    %44 = arith.mulf %39, %43 : vector<16x32xf32>
    %45 = vector.broadcast %23 : vector<1x32xf32> to vector<16x32xf32>
    %46 = arith.mulf %44, %45 : vector<16x32xf32>
    %47 = vector.broadcast %24 : vector<1x32xf32> to vector<16x32xf32>
    %48 = arith.addf %46, %47 : vector<16x32xf32>
    %c0_24 = arith.constant 0 : index
    %c0_25 = arith.constant 0 : index
    %49 = vector.load %arg8[%c0_24, %c0_25] : memref<16x32xf32, #tpu.memory_space<vmem>>, vector<16x32xf32>
    tpu.vector_store %arg8[%c0_24, %c0_25], %48 {strides = array<i32>} : memref<16x32xf32, #tpu.memory_space<vmem>>, vector<16x32xf32>,
    return
  }
  func.func @transform_0(%arg0: i32) -> (i32, i32) {
    %c0_i32 = arith.constant 0 : i32
    %c0_i32_0 = arith.constant 0 : i32
    return %arg0, %c0_i32 : i32, i32
  }
  func.func @transform_1(%arg0: i32) -> (i32, i32, i32) {
    %c0_i32 = arith.constant 0 : i32
    %c0_i32_0 = arith.constant 0 : i32
    %c0_i32_1 = arith.constant 0 : i32
    %c0_i32_2 = arith.constant 0 : i32
    return %c0_i32, %c0_i32_0, %c0_i32_1 : i32, i32, i32
  }
  func.func @transform_2(%arg0: i32) -> (i32, i32, i32) {
    %c0_i32 = arith.constant 0 : i32
    %c0_i32_0 = arith.constant 0 : i32
    %c0_i32_1 = arith.constant 0 : i32
    %c0_i32_2 = arith.constant 0 : i32
    return %c0_i32, %c0_i32_0, %c0_i32_1 : i32, i32, i32
  }
  func.func @transform_3(%arg0: i32) -> (i32, i32) {
    %c0_i32 = arith.constant 0 : i32
    %c0_i32_0 = arith.constant 0 : i32
    %c0_i32_1 = arith.constant 0 : i32
    return %c0_i32, %c0_i32_0 : i32, i32
  }
  func.func @transform_4(%arg0: i32) -> (i32, i32) {
    %c0_i32 = arith.constant 0 : i32
    %c0_i32_0 = arith.constant 0 : i32
    %c0_i32_1 = arith.constant 0 : i32
    return %c0_i32, %c0_i32_0 : i32, i32
  }
  func.func @transform_5(%arg0: i32) -> (i32, i32) {
    %c0_i32 = arith.constant 0 : i32
    %c0_i32_0 = arith.constant 0 : i32
    %c0_i32_1 = arith.constant 0 : i32
    return %c0_i32, %c0_i32_0 : i32, i32
  }
  func.func @transform_6(%arg0: i32) -> (i32, i32) {
    %c0_i32 = arith.constant 0 : i32
    %c0_i32_0 = arith.constant 0 : i32
    %c0_i32_1 = arith.constant 0 : i32
    return %c0_i32, %c0_i32_0 : i32, i32
  }
  func.func @transform_7(%arg0: i32) -> (i32, i32) {
    %c0_i32 = arith.constant 0 : i32
    %c0_i32_0 = arith.constant 0 : i32
    return %arg0, %c0_i32 : i32, i32
  }
}

</mosaic_0001>

<llo_original>
// kernel: tpu_custom_call.1
$region0: #{tpu_custom_call.1}
  #allocation0 [shape = 'u32[]', space=smem, size = 0x4, offset = 0x4, fixed_abs, tag = 'smem constant byte address 0x4 - core index']
  #allocation1 [shape = 'u32[144,128]{1,0:T(1,128)}', space=vmem, size = 0x12000, scoped, tag = 'internal scratch']
  %s0 = inlined_call_operand.vmem [shape: f32[16,32], index: 0, kind: input, shape index: {}]
  %s1 = inlined_call_operand.vmem [shape: bf16[1,32,64], index: 1, kind: input, shape index: {}]
  %s2 = inlined_call_operand.vmem [shape: f32[1,1,64], index: 2, kind: input, shape index: {}]
  %s3 = inlined_call_operand.vmem [shape: bf16[64,32], index: 3, kind: input, shape index: {}]
  %s4 = inlined_call_operand.vmem [shape: f32[1,32], index: 4, kind: input, shape index: {}]
  %s5 = inlined_call_operand.vmem [shape: f32[1,32], index: 5, kind: input, shape index: {}]
  %s6 = inlined_call_operand.vmem [shape: f32[1,32], index: 6, kind: input, shape index: {}]
  %s7 = inlined_call_operand.hbm [shape: f32[16,32], index: 7, kind: output, shape index: {}]
  %s8 = sld [smem:[#allocation0]]
  $region38: #{tpu_custom_call.1} parent=0
    _
  %s10 = ssub.s32 1, %s8
  %s11 = scalar_select 0, %s10, %s8
  $region1: #{tpu_custom_call.1} parent=0
    #allocation2 [shape = 'u8[8192]{0}', space=vmem, size = 0x2000, scoped, tag = 'output window, operand 0, single buffered']
    #allocation3 [shape = 's32[1]{0}', space=sflag, size = 0x4, scoped, tag = 'scoped memory for tpu_custom_call.1']
    %12 = vsyncpa [#allocation3], 0
    // Predicated region
    $region2: #{tpu_custom_call.1} parent=1 // pred_check
      _
    $region3: #{tpu_custom_call.1} parent=1 // pred_check_branch
      %14 = sbr.rel (0) target = $region5
    $region4: #{tpu_custom_call.1} parent=1 // pred_region
      _
    $region5: #{tpu_custom_call.1} parent=1 // pred_fallthru
      _
    // Predicated region
    $region6: #{tpu_custom_call.1} parent=1 // pred_check
      _
    $region7: #{tpu_custom_call.1} parent=1 // pred_check_branch
      %16 = sbr.rel (0) target = $region9
    $region8: #{tpu_custom_call.1} parent=1 // pred_region
      _
    $region9: #{tpu_custom_call.1} parent=1 // pred_fallthru
      _
    // Predicated region
    $region10: #{tpu_custom_call.1} parent=1 // pred_check
      _
    $region11: #{tpu_custom_call.1} parent=1 // pred_check_branch
      %18 = sbr.rel (0) target = $region13
    $region12: #{tpu_custom_call.1} parent=1 // pred_region
      _
    $region13: #{tpu_custom_call.1} parent=1 // pred_fallthru
      _
    // Predicated region
    $region14: #{tpu_custom_call.1} parent=1 // pred_check
      _
    $region15: #{tpu_custom_call.1} parent=1 // pred_check_branch
      %20 = sbr.rel (0) target = $region17
    $region16: #{tpu_custom_call.1} parent=1 // pred_region
      _
    $region17: #{tpu_custom_call.1} parent=1 // pred_fallthru
      _
    // Predicated region
    $region18: #{tpu_custom_call.1} parent=1 // pred_check
      _
    $region19: #{tpu_custom_call.1} parent=1 // pred_check_branch
      %22 = sbr.rel (0) target = $region21
    $region20: #{tpu_custom_call.1} parent=1 // pred_region
      _
    $region21: #{tpu_custom_call.1} parent=1 // pred_fallthru
      _
    // Predicated region
    $region22: #{tpu_custom_call.1} parent=1 // pred_check
      _
    $region23: #{tpu_custom_call.1} parent=1 // pred_check_branch
      %24 = sbr.rel (0) target = $region25
    $region24: #{tpu_custom_call.1} parent=1 // pred_region
      _
    $region25: #{tpu_custom_call.1} parent=1 // pred_fallthru
      _
    // Predicated region
    $region26: #{tpu_custom_call.1} parent=1 // pred_check
      _
    $region27: #{tpu_custom_call.1} parent=1 // pred_check_branch
      %26 = sbr.rel (0) target = $region29
    $region28: #{tpu_custom_call.1} parent=1 // pred_region
      _
    $region29: #{tpu_custom_call.1} parent=1 // pred_fallthru
      _
    %v28 = vld [vmem:[%s0] sm:$0xff]
    %v29 = vld [vmem:[%s0 + $0x8] sm:$0xff]
    %v30 = vpack.c.bf16 %v29, %v28
    %v31 = vld [vmem:[%s1] sm:$0xf]
    %v32 = vld [vmem:[%s1 + $0x4] sm:$0xf]
    %v33 = vld [vmem:[%s1 + $0x8] sm:$0xf]
    %v34 = vld [vmem:[%s1 + $0xc] sm:$0xf]
    %v35 = vld [vmem:[%s2] sm:$0x1]
    %v37 = vlaneseq
    %v38 = vshrl.u32 %v37, 7
    %v39 = vsub.s32 0, %v38
    %v40 = vrot.slane %v35, %v39
    %v46 = vunpack.c.l.b16 %v31
    %v47 = vunpack.c.l.b16 %v32
    %v48 = vunpack.c.l.b16 %v33
    %v49 = vunpack.c.l.b16 %v34
    %v50 = vpack.c.b16 %v47, %v46
    %v51 = vpack.c.b16 %v49, %v48
    %vm54 = vcmask 261120
    %v56 = vsel %vm54, %v30, 0
    %58 = vmatprep.subr.bf16.mxu0 0
    %59 = vmatpush1.bf16.msra.mxu0 %v50
    %60 = vmatprep.subr.bf16.mxu0 0
    %61 = vmatpush1.bf16.msra.mxu0 %v51
    %62 = vmatprep.subr.bf16.mxu0 0
    %63 = vmatpush1.bf16.msra.mxu0 0
    %64 = vmatprep.subr.bf16.mxu0 0
    %65 = vmatpush1.bf16.msra.mxu0 0
    %66 = vmatprep.subr.bf16.mxu0 0
    %67 = vmatpush1.bf16.msra.mxu0 0
    %68 = vmatprep.subr.bf16.mxu0 0
    %69 = vmatpush1.bf16.msra.mxu0 0
    %70 = vmatprep.subr.bf16.mxu0 0
    %71 = vmatpush1.bf16.msra.mxu0 0
    %72 = vmatprep.subr.bf16.mxu0 0
    %73 = vmatpush1.bf16.msra.mxu0 0
    %74 = vmatprep.subr.bf16.mxu0 0
    %75 = vmatpush1.bf16.msra.mxu0 0
    %76 = vmatprep.subr.bf16.mxu0 0
    %77 = vmatpush1.bf16.msra.mxu0 0
    %78 = vmatprep.subr.bf16.mxu0 0
    %79 = vmatpush1.bf16.msra.mxu0 0
    %80 = vmatprep.subr.bf16.mxu0 0
    %81 = vmatpush1.bf16.msra.mxu0 0
    %82 = vmatprep.subr.bf16.mxu0 0
    %83 = vmatpush1.bf16.msra.mxu0 0
    %84 = vmatprep.subr.bf16.mxu0 0
    %85 = vmatpush1.bf16.msra.mxu0 0
    %86 = vmatprep.subr.bf16.mxu0 0
    %87 = vmatpush1.bf16.msra.mxu0 0
    %88 = vmatprep.subr.bf16.mxu0 0
    %89 = vmatpush1.bf16.msra.mxu0 0
    %90 = vmatprep.mubr.bf16.mxu0 0
    %91 = vmatmul.mubr.bf16.gmra.mrb[0].mxu0 %v56
    %v92 = vpop.f32.mrb[0].mxu0
    %v93 = vadd.f32 %v40, %v92
    %v94 = vpop.f32.mrb[0].mxu0
    %v95 = vpop.f32.mrb[0].mxu0
    %v96 = vadd.f32 %v40, %v95
    %v97 = vpop.f32.mrb[0].mxu0
    %98 = vdwg.mxu0
    %v99 = vmul.f32 %v93, 0.5
    %v100 = vmul.f32 %v96, 0.5
    %v101 = vmul.f32 %v93, 0.70710677
    %v102 = vmul.f32 %v96, 0.70710677
    %v103 = verf.f32.pop %v101
    %v104 = verf.f32.pop %v102
    %v105 = vadd.f32 %v103, 1.0
    %v106 = vadd.f32 %v104, 1.0
    %v107 = vmul.f32 %v99, %v105
    %v108 = vmul.f32 %v100, %v106
    %v109 = vpack.c.bf16 %v108, %v107
    %v110 = vld [vmem:[%s3] sm:$0xf]
    %v111 = vld [vmem:[%s3 + $0x4] sm:$0xf]
    %v112 = vld [vmem:[%s3 + $0x8] sm:$0xf]
    %v113 = vld [vmem:[%s3 + $0xc] sm:$0xf]
    %v114 = vld [vmem:[%s3 + $0x10] sm:$0xf]
    %v115 = vld [vmem:[%s3 + $0x14] sm:$0xf]
    %v116 = vld [vmem:[%s3 + $0x18] sm:$0xf]
    %v117 = vld [vmem:[%s3 + $0x1c] sm:$0xf]
    %v118 = vld [vmem:[%s4] sm:$0x1]
    %v120 = vlaneseq
    %v121 = vshrl.u32 %v120, 7
    %v122 = vsub.s32 0, %v121
    %v123 = vrot.slane %v118, %v122
    %v133 = vunpack.c.l.b16 %v110
    %v134 = vunpack.c.l.b16 %v111
    %v135 = vunpack.c.l.b16 %v112
    %v136 = vunpack.c.l.b16 %v113
    %v137 = vunpack.c.l.b16 %v114
    %v138 = vunpack.c.l.b16 %v115
    %v139 = vunpack.c.l.b16 %v116
    %v140 = vunpack.c.l.b16 %v117
    %v141 = vpack.c.b16 %v134, %v133
    %v142 = vpack.c.b16 %v136, %v135
    %v143 = vpack.c.b16 %v138, %v137
    %v144 = vpack.c.b16 %v140, %v139
    %vm149 = vcmask 523264
    %v151 = vsel %vm149, %v109, 0
    %153 = vmatprep.subr.bf16.mxu0 0
    %154 = vmatpush1.bf16.msra.mxu0 %v141
    %155 = vmatprep.subr.bf16.mxu0 0
    %156 = vmatpush1.bf16.msra.mxu0 %v142
    %157 = vmatprep.subr.bf16.mxu0 0
    %158 = vmatpush1.bf16.msra.mxu0 %v143
    %159 = vmatprep.subr.bf16.mxu0 0
    %160 = vmatpush1.bf16.msra.mxu0 %v144
    %161 = vmatprep.subr.bf16.mxu0 0
    %162 = vmatpush1.bf16.msra.mxu0 0
    %163 = vmatprep.subr.bf16.mxu0 0
    %164 = vmatpush1.bf16.msra.mxu0 0
    %165 = vmatprep.subr.bf16.mxu0 0
    %166 = vmatpush1.bf16.msra.mxu0 0
    %167 = vmatprep.subr.bf16.mxu0 0
    %168 = vmatpush1.bf16.msra.mxu0 0
    %169 = vmatprep.subr.bf16.mxu0 0
    %170 = vmatpush1.bf16.msra.mxu0 0
    %171 = vmatprep.subr.bf16.mxu0 0
    %172 = vmatpush1.bf16.msra.mxu0 0
    %173 = vmatprep.subr.bf16.mxu0 0
    %174 = vmatpush1.bf16.msra.mxu0 0
    %175 = vmatprep.subr.bf16.mxu0 0
    %176 = vmatpush1.bf16.msra.mxu0 0
    %177 = vmatprep.subr.bf16.mxu0 0
    %178 = vmatpush1.bf16.msra.mxu0 0
    %179 = vmatprep.subr.bf16.mxu0 0
    %180 = vmatpush1.bf16.msra.mxu0 0
    %181 = vmatprep.subr.bf16.mxu0 0
    %182 = vmatpush1.bf16.msra.mxu0 0
    %183 = vmatprep.subr.bf16.mxu0 0
    %184 = vmatpush1.bf16.msra.mxu0 0
    %185 = vmatprep.mubr.bf16.mxu0 0
    %186 = vmatmul.mubr.bf16.gmra.mrb[0].mxu0 %v151
    %v187 = vpop.f32.mrb[0].mxu0
    %v188 = vadd.f32 %v123, %v187
    %v189 = vpop.f32.mrb[0].mxu0
    %v190 = vpop.f32.mrb[0].mxu0
    %v191 = vadd.f32 %v123, %v190
    %v192 = vpop.f32.mrb[0].mxu0
    %193 = vdwg.mxu0
    %v194 = vld [vmem:[%s5] sm:$0x1]
    %v195 = vld [vmem:[%s6] sm:$0x1]
    %v196 = vsel %vm54, %v188, 0.0
    %197 = vadd.xlane.f32.xlu0 %v196
    %v198 = vpop.xlane.xlu0 %197
    %v199 = vsel %vm54, %v191, 0.0
    %200 = vadd.xlane.f32.xlu0 %v199
    %v201 = vpop.xlane.xlu0 %200
    %v202 = vrcp.pop 32.0
    %v203 = vmul.f32 %v198, %v202
    %v204 = vmul.f32 %v201, %v202
    %v205 = vsub.f32 %v188, %v203
    %v206 = vsub.f32 %v191, %v204
    %v207 = vmul.f32 %v205, %v205
    %v208 = vmul.f32 %v206, %v206
    %v209 = vsel %vm54, %v207, 0.0
    %210 = vadd.xlane.f32.xlu0 %v209
    %v211 = vpop.xlane.xlu0 %210
    %v212 = vsel %vm54, %v208, 0.0
    %213 = vadd.xlane.f32.xlu0 %v212
    %v214 = vpop.xlane.xlu0 %213
    %v215 = vmul.f32 %v211, %v202
    %v216 = vmul.f32 %v214, %v202
    %v217 = vadd.f32 %v215, 1e-06
    %v218 = vadd.f32 %v216, 1e-06
    %v219 = vrsqrt.pop %v217
    %v220 = vrsqrt.pop %v218
    %v221 = vmul.f32 %v205, %v219
    %v222 = vmul.f32 %v206, %v220
    %v224 = vlaneseq
    %v225 = vshrl.u32 %v224, 7
    %v226 = vsub.s32 0, %v225
    %v227 = vrot.slane %v194, %v226
    %v229 = vmul.f32 %v221, %v227
    %v230 = vmul.f32 %v222, %v227
    %v232 = vlaneseq
    %v233 = vshrl.u32 %v232, 7
    %v234 = vsub.s32 0, %v233
    %v235 = vrot.slane %v195, %v234
    %v237 = vadd.f32 %v229, %v235
    %v238 = vadd.f32 %v230, %v235
    %239 = vst.msk [vmem:[#allocation2] sm:$0xff] %vm54, %v237
    %240 = vst.msk [vmem:[#allocation2 + $0x8] sm:$0xff] %vm54, %v238
    // Predicated region
    $region30: #{tpu_custom_call.1} parent=1 // pred_check
      _
    $region31: #{tpu_custom_call.1} parent=1 // pred_check_branch
      %242 = sbr.rel (0) target = $region33
    $region32: #{tpu_custom_call.1} parent=1 // pred_region
      %s244 = ssub.s32 256, 256
      %245 = vsyncadd [#allocation3], %s244
      %s246 = sshll.u32 [#allocation2], 4
      %s247 = int_to_ptr.vmem [resolvable:$true] %s246
      %252 = dma.vmem_to_hbm [thread:$0]  %s247, 256, %s7, [#allocation3], 128, 128, 8
    $region33: #{tpu_custom_call.1} parent=1 // pred_fallthru
      _
    // Predicated region
    $region34: #{tpu_custom_call.1} parent=1 // pred_check
      _
    $region35: #{tpu_custom_call.1} parent=1 // pred_check_branch
      %254 = sbr.rel (0) target = $region37
    $region36: #{tpu_custom_call.1} parent=1 // pred_region
      %255 = dma.done [#allocation3], 256
    $region37: #{tpu_custom_call.1} parent=1 // pred_fallthru
      _
    %256 = vsyncpa [#allocation3], 1

</llo_original>
